<compile_context>
chip_gen: v7x
topology: tpu7x:2x2x1
jax: 0.10.0
libtpu: 0.0.40
codegen_flags: <defaults>
</compile_context>

<pallas_src>
import functools

import jax
import jax.numpy as jnp
from jax.experimental import pallas as pl
from jax.experimental.pallas import tpu as pltpu

LARGE_NUMBER = 100000.0

# Conservative scoped-VMEM limit that is legal on v5e / v6e / v7x alike.
VMEM_LIMIT_BYTES = 32 * 1024 * 1024


def _round_up(x, m):
    return ((x + m - 1) // m) * m


# --------------------------------------------------------------------------- #
# Linear:  y = x @ W^T + b   (PyTorch nn.Linear layout, weight = (out, in))
# --------------------------------------------------------------------------- #
def _linear_kernel(x_ref, w_ref, b_ref, o_ref, *, mxu_bf16):
    # x_ref: (TM, K), w_ref: (K, TN), b_ref: (1, TN), o_ref: (TM, TN)
    x = x_ref[...]
    w = w_ref[...]
    if mxu_bf16:
        x = x.astype(jnp.bfloat16)
        w = w.astype(jnp.bfloat16)
    acc = jnp.dot(x, w, preferred_element_type=jnp.float32)
    o_ref[...] = (acc + b_ref[...]).astype(o_ref.dtype)


def _choose_tm(m, k, tn, bytes_per_elem=4,
               vmem_budget_bytes=24 * 1024 * 1024, max_tm=1024):
    """Pick an M-tile so double-buffered (TM,K) + (K,TN) + (TM,TN) blocks fit the budget.

    Includes the resident weight block (the previous version ignored it).  Falls back to a
    full-extent block for tiny / ragged M (always legal).
    """
    if m <= 8:
        return m
    fixed = 2 * (k * tn + tn) * bytes_per_elem            # weight + bias, double-buffered
    per_row = 2 * (k + tn) * bytes_per_elem               # x in + y out rows, double-buffered
    cap = max(8, (vmem_budget_bytes - fixed) // max(per_row, 1))
    tm = min(m, cap, max_tm)
    tm = (tm // 8) * 8
    while tm >= 8 and m % tm != 0:                        # keep the grid exact (no ragged tail)
        tm -= 8
    return tm if tm >= 8 else m


def linear_pallas(x, weight, bias=None, *, mxu_bf16=True):
    m, k = x.shape
    n_out = weight.shape[0]
    w = weight.T                                          # (K, Nout)
    b = bias if bias is not None else jnp.zeros((n_out,), jnp.float32)

    # Lane-dense output: pad Nout up to a multiple of 128, slice after the call.
    n_pad = _round_up(n_out, 128)
    if n_pad != n_out:
        w = jnp.pad(w, ((0, 0), (0, n_pad - n_out)))
        b = jnp.pad(b, (0, n_pad - n_out))
    b2 = b.reshape(1, n_pad).astype(jnp.float32)

    tn = min(n_pad, 512)
    while n_pad % tn != 0:                                # exact grid on the Nout axis
        tn -= 128
    tm = _choose_tm(m, k, tn)
    grid = (m // tm, n_pad // tn)

    kernel = functools.partial(_linear_kernel, mxu_bf16=mxu_bf16)
    out = pl.pallas_call(
        kernel,
        out_shape=jax.ShapeDtypeStruct((m, n_pad), jnp.float32),
        grid_spec=pltpu.PrefetchScalarGridSpec(
            num_scalar_prefetch=0,
            grid=grid,
            in_specs=[
                pl.BlockSpec((tm, k), lambda i, j: (i, 0)),
                pl.BlockSpec((k, tn), lambda i, j: (0, j)),
                pl.BlockSpec((1, tn), lambda i, j: (0, j)),
            ],
            out_specs=pl.BlockSpec((tm, tn), lambda i, j: (i, j)),
        ),
        compiler_params=pltpu.CompilerParams(
            dimension_semantics=("parallel", "parallel"),
            vmem_limit_bytes=VMEM_LIMIT_BYTES,
        ),
        cost_estimate=pl.CostEstimate(
            flops=2 * m * k * n_pad,
            transcendentals=0,
            bytes_accessed=4 * (m * k + k * n_pad + m * n_pad),
        ),
    )(x, w, b2)

    return out[:, :n_out] if n_pad != n_out else out


# --------------------------------------------------------------------------- #
# Attention core: per (batch*head, q-tile) scores -> softmax -> att @ v
# --------------------------------------------------------------------------- #
def _attn_core_kernel(q_ref, kt_ref, v_ref, o_ref, att_ref, *,
                      scale, causal, tq, mxu_bf16):
    # q_ref: (1, TQ, HS); kt_ref: (1, HS, N); v_ref: (1, N, HS)
    # o_ref: (1, TQ, HS); att_ref: (1, TQ, N)
    q = q_ref[0]
    kt = kt_ref[0]
    v = v_ref[0]
    if mxu_bf16:
        q = q.astype(jnp.bfloat16)
        kt = kt.astype(jnp.bfloat16)

    # scores = scale * q @ k^T; K already laid out (contract, lane) -> no XLU transpose.
    s = scale * jnp.dot(q, kt, preferred_element_type=jnp.float32)   # (TQ, N) f32

    if causal:
        # TODO(synk): the reference builds a (dmodel, dmodel) tril which only broadcasts
        # when n == dmodel; implemented here with the intended (n, n) causal interpretation.
        row = pl.program_id(1) * tq + jax.lax.broadcasted_iota(jnp.int32, s.shape, 0)
        col = jax.lax.broadcasted_iota(jnp.int32, s.shape, 1)
        s = jnp.where(col <= row, s, -LARGE_NUMBER)

    m_i = jnp.max(s, axis=-1, keepdims=True)
    p = jnp.exp(s - m_i)
    denom = jnp.sum(p, axis=-1, keepdims=True)
    p = p * pl.reciprocal(denom, approx=True)             # divide -> EUP, off the VALU slot

    att_ref[0] = p.astype(att_ref.dtype)

    if mxu_bf16:
        p = p.astype(jnp.bfloat16)
        v = v.astype(jnp.bfloat16)
    o_ref[0] = jnp.dot(p, v, preferred_element_type=jnp.float32).astype(o_ref.dtype)


def _choose_tq(n, hs, att_bytes=4, vmem_budget_bytes=20 * 1024 * 1024, max_tq=512):
    """Pick a query tile so per-step VMEM (k^T + v resident, q/att/o tiles, s/p temporaries)
    stays inside a budget that fits every generation (incl. v7x's 64 MiB part)."""
    if n <= 8:
        return n
    fixed = 2 * 2 * n * hs * 4                            # k^T + v, double-buffered f32
    per_row = 2 * n * att_bytes                           # att out, double-buffered
    per_row += 2 * n * 4                                  # s / p live temporaries (f32)
    per_row += 2 * 2 * hs * 4                             # q in + o out, double-buffered
    cap = max(8, (vmem_budget_bytes - fixed) // max(per_row, 1))
    tq = min(n, cap, max_tq)
    tq = (tq // 8) * 8
    while tq >= 8 and n % tq != 0:                        # exact grid, no ragged tail
        tq -= 8
    return tq if tq >= 8 else n


def _attention_core(q, kT, v, *, scale, causal, mxu_bf16, att_dtype):
    bh, n, hs = q.shape
    tq = _choose_tq(n, hs, att_bytes=jnp.dtype(att_dtype).itemsize)
    n_qt = n // tq

    kernel = functools.partial(_attn_core_kernel, scale=scale, causal=causal,
                               tq=tq, mxu_bf16=mxu_bf16)
    out, att = pl.pallas_call(
        kernel,
        out_shape=(
            jax.ShapeDtypeStruct((bh, n, hs), jnp.float32),
            jax.ShapeDtypeStruct((bh, n, n), att_dtype),
        ),
        grid_spec=pltpu.PrefetchScalarGridSpec(
            num_scalar_prefetch=0,
            grid=(bh, n_qt),
            in_specs=[
                pl.BlockSpec((1, tq, hs), lambda i, j: (i, j, 0)),   # q tile
                pl.BlockSpec((1, hs, n), lambda i, j: (i, 0, 0)),    # k^T (resident over q tiles)
                pl.BlockSpec((1, n, hs), lambda i, j: (i, 0, 0)),    # v   (resident over q tiles)
            ],
            out_specs=(
                pl.BlockSpec((1, tq, hs), lambda i, j: (i, j, 0)),
                pl.BlockSpec((1, tq, n), lambda i, j: (i, j, 0)),
            ),
        ),
        compiler_params=pltpu.CompilerParams(
            dimension_semantics=("parallel", "parallel"),
            vmem_limit_bytes=VMEM_LIMIT_BYTES,
        ),
        cost_estimate=pl.CostEstimate(
            flops=4 * bh * n * n * hs,
            transcendentals=bh * n * n,
            bytes_accessed=4 * (4 * bh * n * hs)
            + jnp.dtype(att_dtype).itemsize * bh * n * n,
        ),
    )(q, kT, v)
    return out, att


# --------------------------------------------------------------------------- #
# Full module forward
# --------------------------------------------------------------------------- #
def attention_forward(x, wqkv, bqkv, wproj, bproj, *,
                      num_heads, head_size, qk_scale=None, causal_mask=False,
                      mxu_bf16=True, att_dtype=jnp.float32):
    """Pallas implementation of Attention.forward. Returns (y, att).

    mxu_bf16: cast MXU operands to bf16 with f32 accumulation (all softmax / bias math stays
              f32).  att_dtype: dtype of the returned attention matrix (bf16 halves the
              dominant HBM writeback if the caller tolerates it)."""
    b, n, d = x.shape
    assert d == num_heads * head_size
    scale = qk_scale if qk_scale is not None else head_size ** (-0.5)

    # qkv projection: (B*N, D) @ (D, 3D)
    qkv = linear_pallas(x.reshape(b * n, d), wqkv, bqkv, mxu_bf16=mxu_bf16)   # (B*N, 3D)

    # rearrange 'b n (grp nh hs) -> grp b nh n hs'  (layout glue only)
    qkv = qkv.reshape(b, n, 3, num_heads, head_size).transpose(2, 0, 3, 1, 4)
    q, k, v = qkv[0], qkv[1], qkv[2]                                          # (B, H, N, HS)

    qf = q.reshape(b * num_heads, n, head_size)
    # K pre-laid as (BH, HS, N): scores RHS is (contract, lane) with N lane-dense.
    ktf = k.reshape(b * num_heads, n, head_size).transpose(0, 2, 1)
    vf = v.reshape(b * num_heads, n, head_size)

    out, att = _attention_core(qf, ktf, vf, scale=scale, causal=causal_mask,
                               mxu_bf16=mxu_bf16, att_dtype=att_dtype)

    att = att.reshape(b, num_heads, n, n)
    # rearrange 'b nh n hs -> b n (nh hs)'
    out = (out.reshape(b, num_heads, n, head_size)
              .transpose(0, 2, 1, 3)
              .reshape(b * n, d))

    y = linear_pallas(out, wproj, bproj, mxu_bf16=mxu_bf16).reshape(b, n, d)
    # attn_drop / proj_drop are identity (default p = 0.0 / inference) — omitted.
    return y, att


if __name__ == "__main__":
    batch = 2
    seq = 8
    num_heads = 4
    head_size = 8
    dmodel = num_heads * head_size        # 32

    key = jax.random.PRNGKey(0)
    kx, kq, kp, kb = jax.random.split(key, 4)

    x = jax.random.normal(kx, (batch, seq, dmodel), dtype=jnp.float32)
    wqkv = jax.random.normal(kq, (3 * dmodel, dmodel), dtype=jnp.float32) * 0.05
    bqkv = None                            # qkv_bias=False (module default)
    wproj = jax.random.normal(kp, (dmodel, dmodel), dtype=jnp.float32) * 0.05
    bproj = jax.random.normal(kb, (dmodel,), dtype=jnp.float32) * 0.05

    # ---- pure-JAX reference (mirrors the PyTorch forward, mask=False, eval mode) ----
    scale = head_size ** (-0.5)
    qkv_ref = x.reshape(batch * seq, dmodel) @ wqkv.T
    qkv_ref = qkv_ref.reshape(batch, seq, 3, num_heads, head_size).transpose(2, 0, 3, 1, 4)
    qr, kr, vr = qkv_ref[0], qkv_ref[1], qkv_ref[2]
    scores = scale * jnp.einsum('bhnd,bhmd->bhnm', qr, kr)
    att_ref = jax.nn.softmax(scores, axis=-1)
    out_ref = jnp.einsum('bhnm,bhmd->bhnd', att_ref, vr)
    out_ref = out_ref.transpose(0, 2, 1, 3).reshape(batch * seq, dmodel)
    y_ref = (out_ref @ wproj.T + bproj).reshape(batch, seq, dmodel)

    # ---- f32-MXU path: tight tolerance check ----
    y32, att32 = attention_forward(x, wqkv, bqkv, wproj, bproj,
                                   num_heads=num_heads, head_size=head_size,
                                   mxu_bf16=False)
    y32 = jax.block_until_ready(y32)
    att32 = jax.block_until_ready(att32)
    assert y32.shape == (batch, seq, dmodel)
    assert att32.shape == (batch, num_heads, seq, seq)
    assert jnp.allclose(att32, att_ref, atol=1e-3, rtol=1e-3)
    assert jnp.allclose(y32, y_ref, atol=1e-3, rtol=1e-3)

    # ---- default bf16-MXU path (f32 accumulate): loose tolerance check ----
    y, att = attention_forward(x, wqkv, bqkv, wproj, bproj,
                               num_heads=num_heads, head_size=head_size)
    y = jax.block_until_ready(y)
    att = jax.block_until_ready(att)
    assert y.shape == (batch, seq, dmodel)
    assert att.shape == (batch, num_heads, seq, seq)
    assert jnp.allclose(att, att_ref, atol=2e-2, rtol=2e-2)
    assert jnp.allclose(y, y_ref, atol=5e-2, rtol=5e-2)

    print("KERNEL_OK")
</pallas_src>

<mosaic_0001>
module attributes {stable_mosaic.version = 11 : i64} {
  func.func @_linear_kernel(%arg0: i32, %arg1: i32, %arg2: memref<16x32xf32, #tpu.memory_space<vmem>>, %arg3: memref<32x128xf32, #tpu.memory_space<vmem>>, %arg4: memref<1x128xf32, #tpu.memory_space<vmem>>, %arg5: memref<16x128xf32, #tpu.memory_space<vmem>>) attributes {dimension_semantics = [#tpu.dimension_semantics<parallel>, #tpu.dimension_semantics<parallel>], iteration_bounds = array<i64: 1, 1>, scalar_prefetch = 0 : i64, scratch_operands = 0 : i64, tpu.core_type = #tpu.core_type<tc>, window_params = [{transform_indices = @transform_0, window_bounds = array<i64: 16, 32>}, {transform_indices = @transform_1, window_bounds = array<i64: 32, 128>}, {transform_indices = @transform_2, window_bounds = array<i64: 1, 128>}, {transform_indices = @transform_3, window_bounds = array<i64: 16, 128>}]} {
    %c0 = arith.constant 0 : index
    %c0_0 = arith.constant 0 : index
    %0 = vector.load %arg2[%c0, %c0_0] : memref<16x32xf32, #tpu.memory_space<vmem>>, vector<16x32xf32>
    %c0_1 = arith.constant 0 : index
    %c0_2 = arith.constant 0 : index
    %1 = vector.load %arg3[%c0_1, %c0_2] : memref<32x128xf32, #tpu.memory_space<vmem>>, vector<32x128xf32>
    %cst = arith.constant dense<0.000000e+00> : vector<16x128xf32>
    %2 = tpu.matmul %0, %1, %cst {dimension_numbers = #tpu.dot_dimension_numbers<[1], [0], [0], [1], [0, 0, 1, 1], [], []>} : vector<16x32xf32>, vector<32x128xf32>, vector<16x128xf32> -> vector<16x128xf32>
    %c0_3 = arith.constant 0 : index
    %c0_4 = arith.constant 0 : index
    %3 = vector.load %arg4[%c0_3, %c0_4] : memref<1x128xf32, #tpu.memory_space<vmem>>, vector<1x128xf32>
    %4 = vector.broadcast %3 : vector<1x128xf32> to vector<16x128xf32>
    %5 = arith.addf %2, %4 : vector<16x128xf32>
    %c0_5 = arith.constant 0 : index
    %c0_6 = arith.constant 0 : index
    %6 = vector.load %arg5[%c0_5, %c0_6] : memref<16x128xf32, #tpu.memory_space<vmem>>, vector<16x128xf32>
    tpu.vector_store %arg5[%c0_5, %c0_6], %5 {strides = array<i32>} : memref<16x128xf32, #tpu.memory_space<vmem>>, vector<16x128xf32>,
    return
  }
  func.func @transform_0(%arg0: i32, %arg1: i32) -> (i32, i32) {
    %c0_i32 = arith.constant 0 : i32
    %c0_i32_0 = arith.constant 0 : i32
    return %arg0, %c0_i32 : i32, i32
  }
  func.func @transform_1(%arg0: i32, %arg1: i32) -> (i32, i32) {
    %c0_i32 = arith.constant 0 : i32
    %c0_i32_0 = arith.constant 0 : i32
    return %c0_i32, %arg1 : i32, i32
  }
  func.func @transform_2(%arg0: i32, %arg1: i32) -> (i32, i32) {
    %c0_i32 = arith.constant 0 : i32
    %c0_i32_0 = arith.constant 0 : i32
    return %c0_i32, %arg1 : i32, i32
  }
  func.func @transform_3(%arg0: i32, %arg1: i32) -> (i32, i32) {
    %c0_i32 = arith.constant 0 : i32
    return %arg0, %arg1 : i32, i32
  }
}

</mosaic_0001>

<llo_original>
// kernel: tpu_custom_call.1
$region0: #{tpu_custom_call.1}
  #allocation0 [shape = 'u32[]', space=smem, size = 0x4, offset = 0x4, fixed_abs, tag = 'smem constant byte address 0x4 - core index']
  #allocation1 [shape = 'u32[144,128]{1,0:T(1,128)}', space=vmem, size = 0x12000, scoped, tag = 'internal scratch']
  %s0 = inlined_call_operand.hbm [shape: f32[16,32], index: 0, kind: input, shape index: {}]
  %s1 = inlined_call_operand.hbm [shape: f32[32,128], index: 1, kind: input, shape index: {}]
  %s2 = inlined_call_operand.vmem [shape: f32[1,128], index: 2, kind: input, shape index: {}]
  %s3 = inlined_call_operand.hbm [shape: f32[16,128], index: 3, kind: output, shape index: {}]
  %s4 = sld [smem:[#allocation0]]
  $region30: #{tpu_custom_call.1} parent=0
    _
  %s6 = ssub.s32 1, %s4
  %s7 = scalar_select 0, %s6, %s4
  $region1: #{tpu_custom_call.1} parent=0
    #allocation2 [shape = 'u8[8192]{0}', space=vmem, size = 0x2000, scoped, tag = 'input window, operand 0, single buffered']
    #allocation3 [shape = 's32[1]{0}', space=sflag, size = 0x4, scoped, tag = 'scoped memory for tpu_custom_call.1']
    #allocation4 [shape = 's32[1]{0}', space=sflag, size = 0x4, scoped, tag = 'scoped memory for tpu_custom_call.1']
    #allocation5 [shape = 'u8[16384]{0}', space=vmem, size = 0x4000, scoped, tag = 'input window, operand 1, single buffered']
    #allocation6 [shape = 's32[1]{0}', space=sflag, size = 0x4, scoped, tag = 'scoped memory for tpu_custom_call.1']
    #allocation7 [shape = 'u8[8192]{0}', space=vmem, size = 0x2000, scoped, tag = 'output window, operand 0, single buffered']
    %8 = vsyncpa [#allocation3], 0
    %9 = vsyncpa [#allocation6], 0
    %10 = vsyncpa [#allocation4], 0
    // Predicated region
    $region2: #{tpu_custom_call.1} parent=1 // pred_check
      _
    $region3: #{tpu_custom_call.1} parent=1 // pred_check_branch
      %12 = sbr.rel (0) target = $region5
    $region4: #{tpu_custom_call.1} parent=1 // pred_region
      %s14 = ssub.s32 256, 256
      %15 = vsyncadd [#allocation3], %s14
      %s16 = sshll.u32 [#allocation2], 4
      %s17 = int_to_ptr.vmem [resolvable:$true] %s16
      %22 = dma.hbm_to_vmem [thread:$0]  %s0, 256, %s17, [#allocation3], 128, 128, 8
    $region5: #{tpu_custom_call.1} parent=1 // pred_fallthru
      _
    // Predicated region
    $region6: #{tpu_custom_call.1} parent=1 // pred_check
      _
    $region7: #{tpu_custom_call.1} parent=1 // pred_check_branch
      %24 = sbr.rel (0) target = $region9
    $region8: #{tpu_custom_call.1} parent=1 // pred_region
      %s26 = ssub.s32 512, 512
      %27 = vsyncadd [#allocation6], %s26
      %s28 = sshll.u32 [#allocation5], 4
      %s29 = int_to_ptr.vmem [resolvable:$true] %s28
      %34 = dma.hbm_to_vmem [thread:$0]  %s1, 512, %s29, [#allocation6], 128, 128, 8
    $region9: #{tpu_custom_call.1} parent=1 // pred_fallthru
      _
    // Predicated region
    $region10: #{tpu_custom_call.1} parent=1 // pred_check
      _
    $region11: #{tpu_custom_call.1} parent=1 // pred_check_branch
      %36 = sbr.rel (0) target = $region13
    $region12: #{tpu_custom_call.1} parent=1 // pred_region
      _
    $region13: #{tpu_custom_call.1} parent=1 // pred_fallthru
      _
    // Predicated region
    $region14: #{tpu_custom_call.1} parent=1 // pred_check
      _
    $region15: #{tpu_custom_call.1} parent=1 // pred_check_branch
      %38 = sbr.rel (0) target = $region17
    $region16: #{tpu_custom_call.1} parent=1 // pred_region
      %39 = dma.done [#allocation3], 256
    $region17: #{tpu_custom_call.1} parent=1 // pred_fallthru
      _
    // Predicated region
    $region18: #{tpu_custom_call.1} parent=1 // pred_check
      _
    $region19: #{tpu_custom_call.1} parent=1 // pred_check_branch
      %41 = sbr.rel (0) target = $region21
    $region20: #{tpu_custom_call.1} parent=1 // pred_region
      %42 = dma.done [#allocation6], 512
    $region21: #{tpu_custom_call.1} parent=1 // pred_fallthru
      _
    %v43 = vld [vmem:[#allocation2] sm:$0xff]
    %v44 = vld [vmem:[#allocation2 + $0x8] sm:$0xff]
    %v45 = vld [vmem:[#allocation5] sm:$0xff]
    %v46 = vld [vmem:[#allocation5 + $0x8] sm:$0xff]
    %v47 = vld [vmem:[#allocation5 + $0x10] sm:$0xff]
    %v48 = vld [vmem:[#allocation5 + $0x18] sm:$0xff]
    %v49 = vld [vmem:[%s2] sm:$0x1]
    %v51 = vlaneseq
    %v52 = vshrl.u32 %v51, 7
    %v53 = vsub.s32 0, %v52
    %v54 = vrot.slane %v49, %v53
    %vm56 = vcmask 261120
    %v58 = vsel %vm56, %v43, 0
    %v61 = vsel %vm56, %v44, 0
    %63 = vmatprep.subr.mxu0 0.0
    %64 = vmatpush1.msra.mxu0 %v45
    %65 = vmatprep.subr.mxu0 0.0
    %66 = vmatpush1.msra.mxu0 %v46
    %67 = vmatprep.subr.mxu0 0.0
    %68 = vmatpush1.msra.mxu0 %v47
    %69 = vmatprep.subr.mxu0 0.0
    %70 = vmatpush1.msra.mxu0 %v48
    %71 = vmatprep.subr.mxu0 0.0
    %72 = vmatpush1.msra.mxu0 0.0
    %73 = vmatprep.subr.mxu0 0.0
    %74 = vmatpush1.msra.mxu0 0.0
    %75 = vmatprep.subr.mxu0 0.0
    %76 = vmatpush1.msra.mxu0 0.0
    %77 = vmatprep.subr.mxu0 0.0
    %78 = vmatpush1.msra.mxu0 0.0
    %79 = vmatprep.subr.mxu0 0.0
    %80 = vmatpush1.msra.mxu0 0.0
    %81 = vmatprep.subr.mxu0 0.0
    %82 = vmatpush1.msra.mxu0 0.0
    %83 = vmatprep.subr.mxu0 0.0
    %84 = vmatpush1.msra.mxu0 0.0
    %85 = vmatprep.subr.mxu0 0.0
    %86 = vmatpush1.msra.mxu0 0.0
    %87 = vmatprep.subr.mxu0 0.0
    %88 = vmatpush1.msra.mxu0 0.0
    %89 = vmatprep.subr.mxu0 0.0
    %90 = vmatpush1.msra.mxu0 0.0
    %91 = vmatprep.subr.mxu0 0.0
    %92 = vmatpush1.msra.mxu0 0.0
    %93 = vmatprep.subr.mxu0 0.0
    %94 = vmatpush1.msra.mxu0 0.0
    %95 = vmatprep.subr.mxu0 0.0
    %96 = vmatpush1.msra.mxu0 0.0
    %97 = vmatprep.subr.mxu0 0.0
    %98 = vmatpush1.msra.mxu0 0.0
    %99 = vmatprep.subr.mxu0 0.0
    %100 = vmatpush1.msra.mxu0 0.0
    %101 = vmatprep.subr.mxu0 0.0
    %102 = vmatpush1.msra.mxu0 0.0
    %103 = vmatprep.subr.mxu0 0.0
    %104 = vmatpush1.msra.mxu0 0.0
    %105 = vmatprep.subr.mxu0 0.0
    %106 = vmatpush1.msra.mxu0 0.0
    %107 = vmatprep.subr.mxu0 0.0
    %108 = vmatpush1.msra.mxu0 0.0
    %109 = vmatprep.subr.mxu0 0.0
    %110 = vmatpush1.msra.mxu0 0.0
    %111 = vmatprep.subr.mxu0 0.0
    %112 = vmatpush1.msra.mxu0 0.0
    %113 = vmatprep.subr.mxu0 0.0
    %114 = vmatpush1.msra.mxu0 0.0
    %115 = vmatprep.subr.mxu0 0.0
    %116 = vmatpush1.msra.mxu0 0.0
    %117 = vmatprep.subr.mxu0 0.0
    %118 = vmatpush1.msra.mxu0 0.0
    %119 = vmatprep.subr.mxu0 0.0
    %120 = vmatpush1.msra.mxu0 0.0
    %121 = vmatprep.subr.mxu0 0.0
    %122 = vmatpush1.msra.mxu0 0.0
    %123 = vmatprep.subr.mxu0 0.0
    %124 = vmatpush1.msra.mxu0 0.0
    %125 = vmatprep.subr.mxu0 0.0
    %126 = vmatpush1.msra.mxu0 0.0
    %127 = vmatprep.mubr.f32.mxu0 0.0
    %128 = vmatmul.mubr.f32.gmra.mrb[0].mxu0 %v58
    %v129 = vpop.f32.mrb[0].mxu0
    %v130 = vadd.f32 %v54, %v129
    %v131 = vpop.f32.mrb[0].mxu0
    %132 = vmatprep.mubr.f32.mxu0 0.0
    %133 = vmatmul.mubr.f32.gmra.mrb[0].mxu0 %v61
    %v134 = vpop.f32.mrb[0].mxu0
    %v135 = vadd.f32 %v54, %v134
    %v136 = vpop.f32.mrb[0].mxu0
    %137 = vdwg.mxu0
    %138 = vst [vmem:[#allocation7] sm:$0xff] %v130
    %139 = vst [vmem:[#allocation7 + $0x8] sm:$0xff] %v135
    // Predicated region
    $region22: #{tpu_custom_call.1} parent=1 // pred_check
      _
    $region23: #{tpu_custom_call.1} parent=1 // pred_check_branch
      %141 = sbr.rel (0) target = $region25
    $region24: #{tpu_custom_call.1} parent=1 // pred_region
      %s143 = ssub.s32 256, 256
      %144 = vsyncadd [#allocation4], %s143
      %s145 = sshll.u32 [#allocation7], 4
      %s146 = int_to_ptr.vmem [resolvable:$true] %s145
      %151 = dma.vmem_to_hbm [thread:$0]  %s146, 256, %s3, [#allocation4], 128, 128, 8
    $region25: #{tpu_custom_call.1} parent=1 // pred_fallthru
      _
    // Predicated region
    $region26: #{tpu_custom_call.1} parent=1 // pred_check
      _
    $region27: #{tpu_custom_call.1} parent=1 // pred_check_branch
      %153 = sbr.rel (0) target = $region29
    $region28: #{tpu_custom_call.1} parent=1 // pred_region
      %154 = dma.done [#allocation4], 256
    $region29: #{tpu_custom_call.1} parent=1 // pred_fallthru
      _
    %155 = vsyncpa [#allocation3], 1
    %156 = vsyncpa [#allocation6], 1
    %157 = vsyncpa [#allocation4], 1

</llo_original>
